<compile_context>
chip_gen: v7x
topology: tpu7x:2x2x1
jax: 0.10.0
libtpu: 0.0.40
codegen_flags: <defaults>
</compile_context>

<pallas_src>
import functools

import jax
import jax.numpy as jnp
import numpy as np
from jax.experimental import pallas as pl
from jax.experimental.pallas import tpu as pltpu

HIDDEN = 128


def _round_up(x, m):
    return (x + m - 1) // m * m


def _actor_critic_kernel(x_ref, w1_ref, b1_ref, w2_ref, b2_ref, w3_ref, b3_ref,
                         out_ref, *, action_size):
    x = x_ref[...]                                                   # (Bb, S)  bf16

    # Layer 1 (both heads fused):  (Bb, S) @ (S, 2H) -> (Bb, 2H)
    h = jnp.dot(x, w1_ref[...], preferred_element_type=jnp.float32) + b1_ref[...]
    h = jnp.maximum(h, 0.0).astype(w2_ref.dtype)

    # Layer 2 (block-diagonal):    (Bb, 2H) @ (2H, 2H) -> (Bb, 2H)
    h = jnp.dot(h, w2_ref[...], preferred_element_type=jnp.float32) + b2_ref[...]
    h = jnp.maximum(h, 0.0).astype(w3_ref.dtype)

    # Layer 3 (block-diagonal, lane-padded): (Bb, 2H) @ (2H, OUT_PAD) -> (Bb, OUT_PAD)
    y = jnp.dot(h, w3_ref[...], preferred_element_type=jnp.float32) + b3_ref[...]

    # lanes [0:A] = actor logits, lane A = critic value, rest = 0
    lane = jax.lax.broadcasted_iota(jnp.int32, y.shape, dimension=1)
    actor_mask = lane < action_size

    # masked, numerically-stable softmax over the actor lanes (f32 math)
    logits = jnp.where(actor_mask, y, jnp.float32(-1e30))
    m = jnp.max(logits, axis=-1, keepdims=True)
    e = jnp.where(actor_mask, jnp.exp(logits - m), 0.0)
    denom = jnp.sum(e, axis=-1, keepdims=True)
    probs = e * pl.reciprocal(denom, approx=True)

    out = jnp.where(actor_mask, probs, jnp.where(lane == action_size, y, 0.0))
    out_ref[...] = out.astype(out_ref.dtype)


def pack_params(p, action_size, hidden=HIDDEN, compute_dtype=jnp.bfloat16):
    """Pack per-layer actor/critic params into fused block-diagonal weights."""
    out_pad = max(128, _round_up(action_size + 1, 128))
    zeros_h = jnp.zeros((hidden, hidden), jnp.float32)

    w1 = jnp.concatenate([p["aw1"], p["cw1"]], axis=1)               # (S, 2H)
    b1 = jnp.concatenate([p["ab1"], p["cb1"]], axis=1)               # (1, 2H)
    w2 = jnp.block([[p["aw2"], zeros_h], [zeros_h, p["cw2"]]])       # (2H, 2H)
    b2 = jnp.concatenate([p["ab2"], p["cb2"]], axis=1)               # (1, 2H)

    w3 = jnp.zeros((2 * hidden, out_pad), jnp.float32)
    w3 = w3.at[:hidden, :action_size].set(p["aw3"])
    w3 = w3.at[hidden:, action_size].set(p["cw3"][:, 0])
    b3 = jnp.zeros((1, out_pad), jnp.float32)
    b3 = b3.at[0, :action_size].set(p["ab3"][0])
    b3 = b3.at[0, action_size].set(p["cb3"][0, 0])

    return dict(
        w1=w1.astype(compute_dtype), b1=b1.astype(jnp.float32),
        w2=w2.astype(compute_dtype), b2=b2.astype(jnp.float32),
        w3=w3.astype(compute_dtype), b3=b3.astype(jnp.float32),
    )


def actor_critic_forward(state, packed, action_size, *, block_b=512,
                         compute_dtype=jnp.bfloat16):
    """state: (B, state_size) f32. packed: output of pack_params. -> (probs, value)."""
    B, S = state.shape
    out_pad = packed["w3"].shape[1]
    h2 = packed["w1"].shape[1]

    b_blk = min(block_b, _round_up(B, 8))
    b_pad = _round_up(B, b_blk)
    x = state.astype(compute_dtype)
    if b_pad != B:
        x = jnp.pad(x, ((0, b_pad - B), (0, 0)))

    grid = (b_pad // b_blk,)

    def weight_spec(arr):
        return pl.BlockSpec(arr.shape, lambda i: (0, 0))

    flops = 2 * b_pad * (S * h2 + h2 * h2 + h2 * out_pad)
    bytes_accessed = (
        x.size * x.dtype.itemsize
        + sum(int(v.size) * v.dtype.itemsize for v in packed.values())
        + b_pad * out_pad * 4
    )
    cost = pl.CostEstimate(flops=flops,
                           transcendentals=b_pad * (action_size + 1),
                           bytes_accessed=bytes_accessed)

    out = pl.pallas_call(
        functools.partial(_actor_critic_kernel, action_size=action_size),
        out_shape=jax.ShapeDtypeStruct((b_pad, out_pad), jnp.float32),
        grid=grid,
        in_specs=[
            pl.BlockSpec((b_blk, S), lambda i: (i, 0)),
            weight_spec(packed["w1"]), weight_spec(packed["b1"]),
            weight_spec(packed["w2"]), weight_spec(packed["b2"]),
            weight_spec(packed["w3"]), weight_spec(packed["b3"]),
        ],
        out_specs=pl.BlockSpec((b_blk, out_pad), lambda i: (i, 0)),
        compiler_params=pltpu.CompilerParams(
            dimension_semantics=("parallel",),
            vmem_limit_bytes=32 * 1024 * 1024,
        ),
        cost_estimate=cost,
    )(x, packed["w1"], packed["b1"], packed["w2"], packed["b2"],
      packed["w3"], packed["b3"])

    probs = out[:B, :action_size]
    value = out[:B, action_size:action_size + 1]
    return probs, value


# ----------------------------------------------------------------------------- helpers


def _init_linear(key, fan_in, fan_out):
    # PyTorch nn.Linear default: U(-1/sqrt(fan_in), 1/sqrt(fan_in)) for W and b.
    kw, kb = jax.random.split(key)
    bound = 1.0 / np.sqrt(fan_in)
    w = jax.random.uniform(kw, (fan_in, fan_out), jnp.float32, -bound, bound)  # (in, out)
    b = jax.random.uniform(kb, (1, fan_out), jnp.float32, -bound, bound)
    return w, b


def init_params(key, state_size, action_size, hidden=HIDDEN):
    keys = jax.random.split(key, 6)
    aw1, ab1 = _init_linear(keys[0], state_size, hidden)
    aw2, ab2 = _init_linear(keys[1], hidden, hidden)
    aw3, ab3 = _init_linear(keys[2], hidden, action_size)
    cw1, cb1 = _init_linear(keys[3], state_size, hidden)
    cw2, cb2 = _init_linear(keys[4], hidden, hidden)
    cw3, cb3 = _init_linear(keys[5], hidden, 1)
    return dict(aw1=aw1, ab1=ab1, aw2=aw2, ab2=ab2, aw3=aw3, ab3=ab3,
                cw1=cw1, cb1=cb1, cw2=cw2, cb2=cb2, cw3=cw3, cb3=cb3)


def _reference_forward_f32(state, p):
    def mlp(x, w1, b1, w2, b2, w3, b3):
        h = jnp.maximum(x @ w1 + b1, 0.0)
        h = jnp.maximum(h @ w2 + b2, 0.0)
        return h @ w3 + b3

    logits = mlp(state, p["aw1"], p["ab1"], p["aw2"], p["ab2"], p["aw3"], p["ab3"])
    probs = jax.nn.softmax(logits, axis=-1)
    value = mlp(state, p["cw1"], p["cb1"], p["cw2"], p["cb2"], p["cw3"], p["cb3"])
    return probs, value


def _reference_forward_packed(state, packed, action_size, compute_dtype=jnp.bfloat16):
    """Same bf16-in / f32-accumulate math as the kernel (minus approx recip)."""
    x = state.astype(compute_dtype)
    h = jnp.dot(x, packed["w1"], preferred_element_type=jnp.float32) + packed["b1"]
    h = jnp.maximum(h, 0.0).astype(compute_dtype)
    h = jnp.dot(h, packed["w2"], preferred_element_type=jnp.float32) + packed["b2"]
    h = jnp.maximum(h, 0.0).astype(compute_dtype)
    y = jnp.dot(h, packed["w3"], preferred_element_type=jnp.float32) + packed["b3"]
    logits = y[:, :action_size]
    probs = jax.nn.softmax(logits, axis=-1)
    value = y[:, action_size:action_size + 1]
    return probs, value


if __name__ == "__main__":
    STATE_SIZE = 16
    ACTION_SIZE = 4
    BATCH = 8

    key = jax.random.PRNGKey(0)
    k_state, k_params = jax.random.split(key)

    state = jax.random.normal(k_state, (BATCH, STATE_SIZE), jnp.float32)
    params = init_params(k_params, STATE_SIZE, ACTION_SIZE)
    packed = pack_params(params, ACTION_SIZE)

    probs, value = actor_critic_forward(state, packed, ACTION_SIZE)
    probs = jax.block_until_ready(probs)
    value = jax.block_until_ready(value)

    # 1) semantics vs. the original f32 module (loose: bf16 streaming + approx recip)
    ref_probs, ref_value = _reference_forward_f32(state, params)
    np.testing.assert_allclose(np.asarray(probs), np.asarray(ref_probs), rtol=5e-2, atol=5e-2)
    np.testing.assert_allclose(np.asarray(value), np.asarray(ref_value), rtol=5e-2, atol=5e-2)

    # 2) exact same bf16/f32-accum math as the kernel (tight)
    pk_probs, pk_value = _reference_forward_packed(state, packed, ACTION_SIZE)
    np.testing.assert_allclose(np.asarray(probs), np.asarray(pk_probs), rtol=5e-3, atol=5e-3)
    np.testing.assert_allclose(np.asarray(value), np.asarray(pk_value), rtol=5e-3, atol=5e-3)

    # 3) softmax rows sum to ~1 (approx reciprocal tolerance)
    np.testing.assert_allclose(np.asarray(probs).sum(-1), np.ones(BATCH), rtol=1e-2, atol=1e-2)

    print("KERNEL_OK")
</pallas_src>

<mosaic_0001>
module attributes {stable_mosaic.version = 11 : i64} {
  func.func @_actor_critic_kernel(%arg0: i32, %arg1: memref<8x16xbf16, #tpu.memory_space<vmem>>, %arg2: memref<16x256xbf16, #tpu.memory_space<vmem>>, %arg3: memref<1x256xf32, #tpu.memory_space<vmem>>, %arg4: memref<256x256xbf16, #tpu.memory_space<vmem>>, %arg5: memref<1x256xf32, #tpu.memory_space<vmem>>, %arg6: memref<256x128xbf16, #tpu.memory_space<vmem>>, %arg7: memref<1x128xf32, #tpu.memory_space<vmem>>, %arg8: memref<8x128xf32, #tpu.memory_space<vmem>>) attributes {dimension_semantics = [#tpu.dimension_semantics<parallel>], iteration_bounds = array<i64: 1>, scalar_prefetch = 0 : i64, scratch_operands = 0 : i64, tpu.core_type = #tpu.core_type<tc>, window_params = [{transform_indices = @transform_0, window_bounds = array<i64: 8, 16>}, {pipeline_mode = #tpu.pipeline_mode<synchronous>, transform_indices = @transform_1, window_bounds = array<i64: 16, 256>}, {pipeline_mode = #tpu.pipeline_mode<synchronous>, transform_indices = @transform_2, window_bounds = array<i64: 1, 256>}, {pipeline_mode = #tpu.pipeline_mode<synchronous>, transform_indices = @transform_3, window_bounds = array<i64: 256, 256>}, {pipeline_mode = #tpu.pipeline_mode<synchronous>, transform_indices = @transform_4, window_bounds = array<i64: 1, 256>}, {pipeline_mode = #tpu.pipeline_mode<synchronous>, transform_indices = @transform_5, window_bounds = array<i64: 256, 128>}, {pipeline_mode = #tpu.pipeline_mode<synchronous>, transform_indices = @transform_6, window_bounds = array<i64: 1, 128>}, {transform_indices = @transform_7, window_bounds = array<i64: 8, 128>}]} {
    %c0 = arith.constant 0 : index
    %c0_0 = arith.constant 0 : index
    %0 = vector.load %arg1[%c0, %c0_0] : memref<8x16xbf16, #tpu.memory_space<vmem>>, vector<8x16xbf16>
    %c0_1 = arith.constant 0 : index
    %c0_2 = arith.constant 0 : index
    %1 = vector.load %arg2[%c0_1, %c0_2] : memref<16x256xbf16, #tpu.memory_space<vmem>>, vector<16x256xbf16>
    %cst = arith.constant dense<0.000000e+00> : vector<8x256xf32>
    %2 = tpu.matmul %0, %1, %cst {dimension_numbers = #tpu.dot_dimension_numbers<[1], [0], [0], [1], [0, 0, 1, 1], [], []>} : vector<8x16xbf16>, vector<16x256xbf16>, vector<8x256xf32> -> vector<8x256xf32>
    %c0_3 = arith.constant 0 : index
    %c0_4 = arith.constant 0 : index
    %3 = vector.load %arg3[%c0_3, %c0_4] : memref<1x256xf32, #tpu.memory_space<vmem>>, vector<1x256xf32>
    %4 = vector.broadcast %3 : vector<1x256xf32> to vector<8x256xf32>
    %5 = arith.addf %2, %4 : vector<8x256xf32>
    %cst_5 = arith.constant 0.000000e+00 : f32
    %6 = vector.broadcast %cst_5 : f32 to vector<8x256xf32>
    %7 = arith.maximumf %5, %6 : vector<8x256xf32>
    %8 = arith.truncf %7 : vector<8x256xf32> to vector<8x256xbf16>
    %c0_6 = arith.constant 0 : index
    %c0_7 = arith.constant 0 : index
    %9 = vector.load %arg4[%c0_6, %c0_7] : memref<256x256xbf16, #tpu.memory_space<vmem>>, vector<256x256xbf16>
    %cst_8 = arith.constant dense<0.000000e+00> : vector<8x256xf32>
    %10 = tpu.matmul %8, %9, %cst_8 {dimension_numbers = #tpu.dot_dimension_numbers<[1], [0], [0], [1], [0, 0, 1, 1], [], []>} : vector<8x256xbf16>, vector<256x256xbf16>, vector<8x256xf32> -> vector<8x256xf32>
    %c0_9 = arith.constant 0 : index
    %c0_10 = arith.constant 0 : index
    %11 = vector.load %arg5[%c0_9, %c0_10] : memref<1x256xf32, #tpu.memory_space<vmem>>, vector<1x256xf32>
    %12 = vector.broadcast %11 : vector<1x256xf32> to vector<8x256xf32>
    %13 = arith.addf %10, %12 : vector<8x256xf32>
    %cst_11 = arith.constant 0.000000e+00 : f32
    %14 = vector.broadcast %cst_11 : f32 to vector<8x256xf32>
    %15 = arith.maximumf %13, %14 : vector<8x256xf32>
    %16 = arith.truncf %15 : vector<8x256xf32> to vector<8x256xbf16>
    %c0_12 = arith.constant 0 : index
    %c0_13 = arith.constant 0 : index
    %17 = vector.load %arg6[%c0_12, %c0_13] : memref<256x128xbf16, #tpu.memory_space<vmem>>, vector<256x128xbf16>
    %cst_14 = arith.constant dense<0.000000e+00> : vector<8x128xf32>
    %18 = tpu.matmul %16, %17, %cst_14 {dimension_numbers = #tpu.dot_dimension_numbers<[1], [0], [0], [1], [0, 0, 1, 1], [], []>} : vector<8x256xbf16>, vector<256x128xbf16>, vector<8x128xf32> -> vector<8x128xf32>
    %c0_15 = arith.constant 0 : index
    %c0_16 = arith.constant 0 : index
    %19 = vector.load %arg7[%c0_15, %c0_16] : memref<1x128xf32, #tpu.memory_space<vmem>>, vector<1x128xf32>
    %20 = vector.broadcast %19 : vector<1x128xf32> to vector<8x128xf32>
    %21 = arith.addf %18, %20 : vector<8x128xf32>
    %22 = tpu.iota {dimensions = array<i32: 1>} : vector<8x128xi32>
    %c4_i32 = arith.constant 4 : i32
    %23 = vector.broadcast %c4_i32 : i32 to vector<8x128xi32>
    %24 = arith.cmpi slt, %22, %23 : vector<8x128xi32>
    %cst_17 = arith.constant -1.000000e+30 : f32
    %25 = vector.broadcast %cst_17 : f32 to vector<8x128xf32>
    %26 = arith.select %24, %21, %25 : vector<8x128xi1>, vector<8x128xf32>
    %cst_18 = arith.constant dense<0xFF800000> : vector<8xf32>
    %27 = vector.multi_reduction <maximumf>, %26, %cst_18 [1] : vector<8x128xf32> to vector<8xf32>
    %28 = vector.shape_cast %27 : vector<8xf32> to vector<8x1xf32>
    %29 = vector.broadcast %28 : vector<8x1xf32> to vector<8x128xf32>
    %30 = arith.subf %26, %29 : vector<8x128xf32>
    %31 = math.exp %30 : vector<8x128xf32>
    %cst_19 = arith.constant 0.000000e+00 : f32
    %32 = vector.broadcast %cst_19 : f32 to vector<8x128xf32>
    %33 = arith.select %24, %31, %32 : vector<8x128xi1>, vector<8x128xf32>
    %cst_20 = arith.constant dense<0.000000e+00> : vector<8xf32>
    %34 = vector.multi_reduction <add>, %33, %cst_20 [1] : vector<8x128xf32> to vector<8xf32>
    %35 = vector.shape_cast %34 : vector<8xf32> to vector<8x1xf32>
    %36 = tpu.reciprocal %35 {approx = true} : vector<8x1xf32> -> vector<8x1xf32>
    %37 = vector.broadcast %36 : vector<8x1xf32> to vector<8x128xf32>
    %38 = arith.mulf %33, %37 : vector<8x128xf32>
    %c4_i32_21 = arith.constant 4 : i32
    %39 = vector.broadcast %c4_i32_21 : i32 to vector<8x128xi32>
    %40 = arith.cmpi eq, %22, %39 : vector<8x128xi32>
    %cst_22 = arith.constant 0.000000e+00 : f32
    %41 = vector.broadcast %cst_22 : f32 to vector<8x128xf32>
    %42 = arith.select %40, %21, %41 : vector<8x128xi1>, vector<8x128xf32>
    %43 = arith.select %24, %38, %42 : vector<8x128xi1>, vector<8x128xf32>
    %c0_23 = arith.constant 0 : index
    %c0_24 = arith.constant 0 : index
    %44 = vector.load %arg8[%c0_23, %c0_24] : memref<8x128xf32, #tpu.memory_space<vmem>>, vector<8x128xf32>
    tpu.vector_store %arg8[%c0_23, %c0_24], %43 {strides = array<i32>} : memref<8x128xf32, #tpu.memory_space<vmem>>, vector<8x128xf32>,
    return
  }
  func.func @transform_0(%arg0: i32) -> (i32, i32) {
    %c0_i32 = arith.constant 0 : i32
    %c0_i32_0 = arith.constant 0 : i32
    return %arg0, %c0_i32 : i32, i32
  }
  func.func @transform_1(%arg0: i32) -> (i32, i32) {
    %c0_i32 = arith.constant 0 : i32
    %c0_i32_0 = arith.constant 0 : i32
    %c0_i32_1 = arith.constant 0 : i32
    return %c0_i32, %c0_i32_0 : i32, i32
  }
  func.func @transform_2(%arg0: i32) -> (i32, i32) {
    %c0_i32 = arith.constant 0 : i32
    %c0_i32_0 = arith.constant 0 : i32
    %c0_i32_1 = arith.constant 0 : i32
    return %c0_i32, %c0_i32_0 : i32, i32
  }
  func.func @transform_3(%arg0: i32) -> (i32, i32) {
    %c0_i32 = arith.constant 0 : i32
    %c0_i32_0 = arith.constant 0 : i32
    %c0_i32_1 = arith.constant 0 : i32
    return %c0_i32, %c0_i32_0 : i32, i32
  }
  func.func @transform_4(%arg0: i32) -> (i32, i32) {
    %c0_i32 = arith.constant 0 : i32
    %c0_i32_0 = arith.constant 0 : i32
    %c0_i32_1 = arith.constant 0 : i32
    return %c0_i32, %c0_i32_0 : i32, i32
  }
  func.func @transform_5(%arg0: i32) -> (i32, i32) {
    %c0_i32 = arith.constant 0 : i32
    %c0_i32_0 = arith.constant 0 : i32
    %c0_i32_1 = arith.constant 0 : i32
    return %c0_i32, %c0_i32_0 : i32, i32
  }
  func.func @transform_6(%arg0: i32) -> (i32, i32) {
    %c0_i32 = arith.constant 0 : i32
    %c0_i32_0 = arith.constant 0 : i32
    %c0_i32_1 = arith.constant 0 : i32
    return %c0_i32, %c0_i32_0 : i32, i32
  }
  func.func @transform_7(%arg0: i32) -> (i32, i32) {
    %c0_i32 = arith.constant 0 : i32
    %c0_i32_0 = arith.constant 0 : i32
    return %arg0, %c0_i32 : i32, i32
  }
}

</mosaic_0001>

<llo_original>
// kernel: tpu_custom_call.1
$region0: #{tpu_custom_call.1}
  #allocation0 [shape = 'u32[]', space=smem, size = 0x4, offset = 0x4, fixed_abs, tag = 'smem constant byte address 0x4 - core index']
  #allocation1 [shape = 'u32[144,128]{1,0:T(1,128)}', space=vmem, size = 0x12000, scoped, tag = 'internal scratch']
  %s0 = inlined_call_operand.hbm [shape: bf16[8,16], index: 0, kind: input, shape index: {}]
  %s1 = inlined_call_operand.hbm [shape: bf16[16,256], index: 1, kind: input, shape index: {}]
  %s2 = inlined_call_operand.vmem [shape: f32[1,256], index: 2, kind: input, shape index: {}]
  %s3 = inlined_call_operand.hbm [shape: bf16[256,256], index: 3, kind: input, shape index: {}]
  %s4 = inlined_call_operand.vmem [shape: f32[1,256], index: 4, kind: input, shape index: {}]
  %s5 = inlined_call_operand.hbm [shape: bf16[256,128], index: 5, kind: input, shape index: {}]
  %s6 = inlined_call_operand.vmem [shape: f32[1,128], index: 6, kind: input, shape index: {}]
  %s7 = inlined_call_operand.hbm [shape: f32[8,128], index: 7, kind: output, shape index: {}]
  %s8 = sld [smem:[#allocation0]]
  $region54: #{tpu_custom_call.1} parent=0
    _
  %s10 = ssub.s32 1, %s8
  %s11 = scalar_select 0, %s10, %s8
  $region1: #{tpu_custom_call.1} parent=0
    #allocation2 [shape = 'u8[2048]{0}', space=vmem, size = 0x800, scoped, tag = 'input window, operand 0, single buffered']
    #allocation3 [shape = 's32[1]{0}', space=sflag, size = 0x4, scoped, tag = 'scoped memory for tpu_custom_call.1']
    #allocation4 [shape = 's32[1]{0}', space=sflag, size = 0x4, scoped, tag = 'scoped memory for tpu_custom_call.1']
    #allocation5 [shape = 'u8[8192]{0}', space=vmem, size = 0x2000, scoped, tag = 'input window, operand 1, single buffered']
    #allocation6 [shape = 's32[1]{0}', space=sflag, size = 0x4, scoped, tag = 'scoped memory for tpu_custom_call.1']
    #allocation7 [shape = 'u8[131072]{0}', space=vmem, size = 0x20000, scoped, tag = 'input window, operand 3, single buffered']
    #allocation8 [shape = 'u8[65536]{0}', space=vmem, size = 0x10000, scoped, tag = 'input window, operand 5, single buffered']
    #allocation9 [shape = 's32[1]{0}', space=sflag, size = 0x4, scoped, tag = 'scoped memory for tpu_custom_call.1']
    #allocation10 [shape = 'u8[4096]{0}', space=vmem, size = 0x1000, scoped, tag = 'output window, operand 0, single buffered']
    %12 = vsyncpa [#allocation3], 0
    %13 = vsyncpa [#allocation6], 0
    %14 = vsyncpa [#allocation9], 0
    %15 = vsyncpa [#allocation4], 0
    // Predicated region
    $region2: #{tpu_custom_call.1} parent=1 // pred_check
      _
    $region3: #{tpu_custom_call.1} parent=1 // pred_check_branch
      %17 = sbr.rel (0) target = $region5
    $region4: #{tpu_custom_call.1} parent=1 // pred_region
      %s19 = ssub.s32 64, 64
      %20 = vsyncadd [#allocation3], %s19
      %s22 = sshll.u32 [#allocation2], 4
      %s23 = int_to_ptr.vmem [resolvable:$true] %s22
      %25 = dma.hbm_to_vmem [thread:$0]  %s0, 64, %s23, [#allocation3]
    $region5: #{tpu_custom_call.1} parent=1 // pred_fallthru
      _
    // Predicated region
    $region6: #{tpu_custom_call.1} parent=1 // pred_check
      _
    $region7: #{tpu_custom_call.1} parent=1 // pred_check_branch
      %27 = sbr.rel (0) target = $region9
    $region8: #{tpu_custom_call.1} parent=1 // pred_region
      %s29 = ssub.s32 256, 256
      %30 = vsyncadd [#allocation6], %s29
      %s31 = sshll.u32 [#allocation5], 4
      %s32 = int_to_ptr.vmem [resolvable:$true] %s31
      %37 = dma.hbm_to_vmem [thread:$0]  %s1, 256, %s32, [#allocation6], 128, 128, 8
    $region9: #{tpu_custom_call.1} parent=1 // pred_fallthru
      _
    // Predicated region
    $region10: #{tpu_custom_call.1} parent=1 // pred_check
      _
    $region11: #{tpu_custom_call.1} parent=1 // pred_check_branch
      %39 = sbr.rel (0) target = $region13
    $region12: #{tpu_custom_call.1} parent=1 // pred_region
      _
    $region13: #{tpu_custom_call.1} parent=1 // pred_fallthru
      _
    // Predicated region
    $region14: #{tpu_custom_call.1} parent=1 // pred_check
      _
    $region15: #{tpu_custom_call.1} parent=1 // pred_check_branch
      %41 = sbr.rel (0) target = $region17
    $region16: #{tpu_custom_call.1} parent=1 // pred_region
      %s43 = ssub.s32 4096, 4096
      %44 = vsyncadd [#allocation6], %s43
      %s45 = sshll.u32 [#allocation7], 4
      %s46 = int_to_ptr.vmem [resolvable:$true] %s45
      %51 = dma.hbm_to_vmem [thread:$0]  %s3, 4096, %s46, [#allocation6], 128, 128, 8
    $region17: #{tpu_custom_call.1} parent=1 // pred_fallthru
      _
    // Predicated region
    $region18: #{tpu_custom_call.1} parent=1 // pred_check
      _
    $region19: #{tpu_custom_call.1} parent=1 // pred_check_branch
      %53 = sbr.rel (0) target = $region21
    $region20: #{tpu_custom_call.1} parent=1 // pred_region
      _
    $region21: #{tpu_custom_call.1} parent=1 // pred_fallthru
      _
    // Predicated region
    $region22: #{tpu_custom_call.1} parent=1 // pred_check
      _
    $region23: #{tpu_custom_call.1} parent=1 // pred_check_branch
      %55 = sbr.rel (0) target = $region25
    $region24: #{tpu_custom_call.1} parent=1 // pred_region
      %s57 = ssub.s32 2048, 2048
      %58 = vsyncadd [#allocation9], %s57
      %s59 = sshll.u32 [#allocation8], 4
      %s60 = int_to_ptr.vmem [resolvable:$true] %s59
      %65 = dma.hbm_to_vmem [thread:$0]  %s5, 2048, %s60, [#allocation9], 64, 64, 4
    $region25: #{tpu_custom_call.1} parent=1 // pred_fallthru
      _
    // Predicated region
    $region26: #{tpu_custom_call.1} parent=1 // pred_check
      _
    $region27: #{tpu_custom_call.1} parent=1 // pred_check_branch
      %67 = sbr.rel (0) target = $region29
    $region28: #{tpu_custom_call.1} parent=1 // pred_region
      _
    $region29: #{tpu_custom_call.1} parent=1 // pred_fallthru
      _
    // Predicated region
    $region30: #{tpu_custom_call.1} parent=1 // pred_check
      _
    $region31: #{tpu_custom_call.1} parent=1 // pred_check_branch
      %69 = sbr.rel (0) target = $region33
    $region32: #{tpu_custom_call.1} parent=1 // pred_region
      %70 = dma.done [#allocation3], 64
    $region33: #{tpu_custom_call.1} parent=1 // pred_fallthru
      _
    // Predicated region
    $region34: #{tpu_custom_call.1} parent=1 // pred_check
      _
    $region35: #{tpu_custom_call.1} parent=1 // pred_check_branch
      %72 = sbr.rel (0) target = $region37
    $region36: #{tpu_custom_call.1} parent=1 // pred_region
      %73 = dma.done [#allocation6], 256
    $region37: #{tpu_custom_call.1} parent=1 // pred_fallthru
      _
    // Predicated region
    $region38: #{tpu_custom_call.1} parent=1 // pred_check
      _
    $region39: #{tpu_custom_call.1} parent=1 // pred_check_branch
      %75 = sbr.rel (0) target = $region41
    $region40: #{tpu_custom_call.1} parent=1 // pred_region
      %76 = dma.done [#allocation6], 4096
    $region41: #{tpu_custom_call.1} parent=1 // pred_fallthru
      _
    // Predicated region
    $region42: #{tpu_custom_call.1} parent=1 // pred_check
      _
    $region43: #{tpu_custom_call.1} parent=1 // pred_check_branch
      %78 = sbr.rel (0) target = $region45
    $region44: #{tpu_custom_call.1} parent=1 // pred_region
      %79 = dma.done [#allocation9], 2048
    $region45: #{tpu_custom_call.1} parent=1 // pred_fallthru
      _
    %v81 = vld [vmem:[#allocation2] sm:$0xf]
    %v82 = vld [vmem:[#allocation5] sm:$0xff]
    %v83 = vld [vmem:[#allocation5 + $0x8] sm:$0xff]
    %v84 = vld [vmem:[%s2] sm:$0x3]
    %v86 = vlaneseq
    %v87 = vshrl.u32 %v86, 7
    %v88 = vsub.s32 0, %v87
    %v89 = vrot.slane %v84, %v88
    %v90 = vlaneseq
    %v91 = vshrl.u32 %v90, 7
    %v92 = vsub.s32 1, %v91
    %v93 = vrot.slane %v84, %v92
    %v98 = vunpack.c.l.b16 %v82
    %v99 = vunpack.c.h.b16 %v82
    %v100 = vunpack.c.l.b16 %v83
    %v101 = vunpack.c.h.b16 %v83
    %v102 = vpack.c.b16 %v100, %v98
    %v103 = vpack.c.b16 %v101, %v99
    %vm106 = vcmask 130048
    %v108 = vsel %vm106, %v81, 0
    %110 = vmatprep.subr.bf16.mxu0 %v103
    %111 = vmatpush1.bf16.msra.mxu0 %v102
    %112 = vmatprep.subr.bf16.mxu0 0
    %113 = vmatpush1.bf16.msra.mxu0 0
    %114 = vmatprep.subr.bf16.mxu0 0
    %115 = vmatpush1.bf16.msra.mxu0 0
    %116 = vmatprep.subr.bf16.mxu0 0
    %117 = vmatpush1.bf16.msra.mxu0 0
    %118 = vmatprep.subr.bf16.mxu0 0
    %119 = vmatpush1.bf16.msra.mxu0 0
    %120 = vmatprep.subr.bf16.mxu0 0
    %121 = vmatpush1.bf16.msra.mxu0 0
    %122 = vmatprep.subr.bf16.mxu0 0
    %123 = vmatpush1.bf16.msra.mxu0 0
    %124 = vmatprep.subr.bf16.mxu0 0
    %125 = vmatpush1.bf16.msra.mxu0 0
    %126 = vmatprep.subr.bf16.mxu0 0
    %127 = vmatpush1.bf16.msra.mxu0 0
    %128 = vmatprep.subr.bf16.mxu0 0
    %129 = vmatpush1.bf16.msra.mxu0 0
    %130 = vmatprep.subr.bf16.mxu0 0
    %131 = vmatpush1.bf16.msra.mxu0 0
    %132 = vmatprep.subr.bf16.mxu0 0
    %133 = vmatpush1.bf16.msra.mxu0 0
    %134 = vmatprep.subr.bf16.mxu0 0
    %135 = vmatpush1.bf16.msra.mxu0 0
    %136 = vmatprep.subr.bf16.mxu0 0
    %137 = vmatpush1.bf16.msra.mxu0 0
    %138 = vmatprep.subr.bf16.mxu0 0
    %139 = vmatpush1.bf16.msra.mxu0 0
    %140 = vmatprep.subr.bf16.mxu0 0
    %141 = vmatpush1.bf16.msra.mxu0 0
    %142 = vmatprep.mubr.bf16.mxu0 0
    %143 = vmatmul.mubr.bf16.gmra.mrb[0].mxu0 %v108
    %v144 = vpop.f32.mrb[0].mxu0
    %v145 = vadd.f32 %v89, %v144
    %v146 = vpop.f32.mrb[0].mxu0
    %v147 = vadd.f32 %v93, %v146
    %v148 = vpop.f32.mrb[0].mxu0
    %v149 = vpop.f32.mrb[0].mxu0
    %150 = vdwg.mxu0
    %v151 = vmax.f32 %v145, 0.0
    %v152 = vmax.f32 %v147, 0.0
    %v153 = vpack.c.bf16 %v151, %v151
    %v154 = vpack.c.bf16 %v152, %v152
    %v155 = vld [vmem:[#allocation7] sm:$0xff]
    %v156 = vld [vmem:[#allocation7 + $0x8] sm:$0xff]
    %v157 = vld [vmem:[#allocation7 + $0x10] sm:$0xff]
    %v158 = vld [vmem:[#allocation7 + $0x18] sm:$0xff]
    %v159 = vld [vmem:[#allocation7 + $0x20] sm:$0xff]
    %v160 = vld [vmem:[#allocation7 + $0x28] sm:$0xff]
    %v161 = vld [vmem:[#allocation7 + $0x30] sm:$0xff]
    %v162 = vld [vmem:[#allocation7 + $0x38] sm:$0xff]
    %v163 = vld [vmem:[#allocation7 + $0x40] sm:$0xff]
    %v164 = vld [vmem:[#allocation7 + $0x48] sm:$0xff]
    %v165 = vld [vmem:[#allocation7 + $0x50] sm:$0xff]
    %v166 = vld [vmem:[#allocation7 + $0x58] sm:$0xff]
    %v167 = vld [vmem:[#allocation7 + $0x60] sm:$0xff]
    %v168 = vld [vmem:[#allocation7 + $0x68] sm:$0xff]
    %v169 = vld [vmem:[#allocation7 + $0x70] sm:$0xff]
    %v170 = vld [vmem:[#allocation7 + $0x78] sm:$0xff]
    %v171 = vld [vmem:[#allocation7 + $0x80] sm:$0xff]
    %v172 = vld [vmem:[#allocation7 + $0x88] sm:$0xff]
    %v173 = vld [vmem:[#allocation7 + $0x90] sm:$0xff]
    %v174 = vld [vmem:[#allocation7 + $0x98] sm:$0xff]
    %v175 = vld [vmem:[#allocation7 + $0xa0] sm:$0xff]
    %v176 = vld [vmem:[#allocation7 + $0xa8] sm:$0xff]
    %v177 = vld [vmem:[#allocation7 + $0xb0] sm:$0xff]
    %v178 = vld [vmem:[#allocation7 + $0xb8] sm:$0xff]
    %v179 = vld [vmem:[#allocation7 + $0xc0] sm:$0xff]
    %v180 = vld [vmem:[#allocation7 + $0xc8] sm:$0xff]
    %v181 = vld [vmem:[#allocation7 + $0xd0] sm:$0xff]
    %v182 = vld [vmem:[#allocation7 + $0xd8] sm:$0xff]
    %v183 = vld [vmem:[#allocation7 + $0xe0] sm:$0xff]
    %v184 = vld [vmem:[#allocation7 + $0xe8] sm:$0xff]
    %v185 = vld [vmem:[#allocation7 + $0xf0] sm:$0xff]
    %v186 = vld [vmem:[#allocation7 + $0xf8] sm:$0xff]
    %v187 = vld [vmem:[%s4] sm:$0x3]
    %v189 = vlaneseq
    %v190 = vshrl.u32 %v189, 7
    %v191 = vsub.s32 0, %v190
    %v192 = vrot.slane %v187, %v191
    %v193 = vlaneseq
    %v194 = vshrl.u32 %v193, 7
    %v195 = vsub.s32 1, %v194
    %v196 = vrot.slane %v187, %v195
    %v231 = vunpack.c.l.b16 %v155
    %v232 = vunpack.c.h.b16 %v155
    %v233 = vunpack.c.l.b16 %v156
    %v234 = vunpack.c.h.b16 %v156
    %v235 = vunpack.c.l.b16 %v157
    %v236 = vunpack.c.h.b16 %v157
    %v237 = vunpack.c.l.b16 %v158
    %v238 = vunpack.c.h.b16 %v158
    %v239 = vunpack.c.l.b16 %v159
    %v240 = vunpack.c.h.b16 %v159
    %v241 = vunpack.c.l.b16 %v160
    %v242 = vunpack.c.h.b16 %v160
    %v243 = vunpack.c.l.b16 %v161
    %v244 = vunpack.c.h.b16 %v161
    %v245 = vunpack.c.l.b16 %v162
    %v246 = vunpack.c.h.b16 %v162
    %v247 = vunpack.c.l.b16 %v163
    %v248 = vunpack.c.h.b16 %v163
    %v249 = vunpack.c.l.b16 %v164
    %v250 = vunpack.c.h.b16 %v164
    %v251 = vunpack.c.l.b16 %v165
    %v252 = vunpack.c.h.b16 %v165
    %v253 = vunpack.c.l.b16 %v166
    %v254 = vunpack.c.h.b16 %v166
    %v255 = vunpack.c.l.b16 %v167
    %v256 = vunpack.c.h.b16 %v167
    %v257 = vunpack.c.l.b16 %v168
    %v258 = vunpack.c.h.b16 %v168
    %v259 = vunpack.c.l.b16 %v169
    %v260 = vunpack.c.h.b16 %v169
    %v261 = vunpack.c.l.b16 %v170
    %v262 = vunpack.c.h.b16 %v170
    %v263 = vunpack.c.l.b16 %v171
    %v264 = vunpack.c.h.b16 %v171
    %v265 = vunpack.c.l.b16 %v172
    %v266 = vunpack.c.h.b16 %v172
    %v267 = vunpack.c.l.b16 %v173
    %v268 = vunpack.c.h.b16 %v173
    %v269 = vunpack.c.l.b16 %v174
    %v270 = vunpack.c.h.b16 %v174
    %v271 = vunpack.c.l.b16 %v175
    %v272 = vunpack.c.h.b16 %v175
    %v273 = vunpack.c.l.b16 %v176
    %v274 = vunpack.c.h.b16 %v176
    %v275 = vunpack.c.l.b16 %v177
    %v276 = vunpack.c.h.b16 %v177
    %v277 = vunpack.c.l.b16 %v178
    %v278 = vunpack.c.h.b16 %v178
    %v279 = vunpack.c.l.b16 %v179
    %v280 = vunpack.c.h.b16 %v179
    %v281 = vunpack.c.l.b16 %v180
    %v282 = vunpack.c.h.b16 %v180
    %v283 = vunpack.c.l.b16 %v181
    %v284 = vunpack.c.h.b16 %v181
    %v285 = vunpack.c.l.b16 %v182
    %v286 = vunpack.c.h.b16 %v182
    %v287 = vunpack.c.l.b16 %v183
    %v288 = vunpack.c.h.b16 %v183
    %v289 = vunpack.c.l.b16 %v184
    %v290 = vunpack.c.h.b16 %v184
    %v291 = vunpack.c.l.b16 %v185
    %v292 = vunpack.c.h.b16 %v185
    %v293 = vunpack.c.l.b16 %v186
    %v294 = vunpack.c.h.b16 %v186
    %v295 = vpack.c.b16 %v233, %v231
    %v296 = vpack.c.b16 %v234, %v232
    %v297 = vpack.c.b16 %v237, %v235
    %v298 = vpack.c.b16 %v238, %v236
    %v299 = vpack.c.b16 %v241, %v239
    %v300 = vpack.c.b16 %v242, %v240
    %v301 = vpack.c.b16 %v245, %v243
    %v302 = vpack.c.b16 %v246, %v244
    %v303 = vpack.c.b16 %v249, %v247
    %v304 = vpack.c.b16 %v250, %v248
    %v305 = vpack.c.b16 %v253, %v251
    %v306 = vpack.c.b16 %v254, %v252
    %v307 = vpack.c.b16 %v257, %v255
    %v308 = vpack.c.b16 %v258, %v256
    %v309 = vpack.c.b16 %v261, %v259
    %v310 = vpack.c.b16 %v262, %v260
    %v311 = vpack.c.b16 %v265, %v263
    %v312 = vpack.c.b16 %v266, %v264
    %v313 = vpack.c.b16 %v269, %v267
    %v314 = vpack.c.b16 %v270, %v268
    %v315 = vpack.c.b16 %v273, %v271
    %v316 = vpack.c.b16 %v274, %v272
    %v317 = vpack.c.b16 %v277, %v275
    %v318 = vpack.c.b16 %v278, %v276
    %v319 = vpack.c.b16 %v281, %v279
    %v320 = vpack.c.b16 %v282, %v280
    %v321 = vpack.c.b16 %v285, %v283
    %v322 = vpack.c.b16 %v286, %v284
    %v323 = vpack.c.b16 %v289, %v287
    %v324 = vpack.c.b16 %v290, %v288
    %v325 = vpack.c.b16 %v293, %v291
    %v326 = vpack.c.b16 %v294, %v292
    %359 = vmatprep.subr.bf16.mxu0 %v296
    %360 = vmatpush1.bf16.msra.mxu0 %v295
    %361 = vmatprep.subr.bf16.mxu0 %v298
    %362 = vmatpush1.bf16.msra.mxu0 %v297
    %363 = vmatprep.subr.bf16.mxu0 %v300
    %364 = vmatpush1.bf16.msra.mxu0 %v299
    %365 = vmatprep.subr.bf16.mxu0 %v302
    %366 = vmatpush1.bf16.msra.mxu0 %v301
    %367 = vmatprep.subr.bf16.mxu0 %v304
    %368 = vmatpush1.bf16.msra.mxu0 %v303
    %369 = vmatprep.subr.bf16.mxu0 %v306
    %370 = vmatpush1.bf16.msra.mxu0 %v305
    %371 = vmatprep.subr.bf16.mxu0 %v308
    %372 = vmatpush1.bf16.msra.mxu0 %v307
    %373 = vmatprep.subr.bf16.mxu0 %v310
    %374 = vmatpush1.bf16.msra.mxu0 %v309
    %375 = vmatprep.subr.bf16.mxu0 %v312
    %376 = vmatpush1.bf16.msra.mxu0 %v311
    %377 = vmatprep.subr.bf16.mxu0 %v314
    %378 = vmatpush1.bf16.msra.mxu0 %v313
    %379 = vmatprep.subr.bf16.mxu0 %v316
    %380 = vmatpush1.bf16.msra.mxu0 %v315
    %381 = vmatprep.subr.bf16.mxu0 %v318
    %382 = vmatpush1.bf16.msra.mxu0 %v317
    %383 = vmatprep.subr.bf16.mxu0 %v320
    %384 = vmatpush1.bf16.msra.mxu0 %v319
    %385 = vmatprep.subr.bf16.mxu0 %v322
    %386 = vmatpush1.bf16.msra.mxu0 %v321
    %387 = vmatprep.subr.bf16.mxu0 %v324
    %388 = vmatpush1.bf16.msra.mxu0 %v323
    %389 = vmatprep.subr.bf16.mxu0 %v326
    %390 = vmatpush1.bf16.msra.mxu0 %v325
    %391 = vmatprep.mubr.bf16.mxu0 %v154
    %392 = vmatmul.mubr.bf16.gmra.mrb[0].mxu0 %v153
    %v393 = vpop.f32.mrb[0].mxu0
    %v394 = vadd.f32 %v192, %v393
    %v395 = vpop.f32.mrb[0].mxu0
    %v396 = vadd.f32 %v196, %v395
    %v397 = vpop.f32.mrb[0].mxu0
    %v398 = vpop.f32.mrb[0].mxu0
    %399 = vdwg.mxu0
    %v400 = vmax.f32 %v394, 0.0
    %v401 = vmax.f32 %v396, 0.0
    %v402 = vpack.c.bf16 %v400, %v400
    %v403 = vpack.c.bf16 %v401, %v401
    %v404 = vld [vmem:[#allocation8] sm:$0xf]
    %v405 = vld [vmem:[#allocation8 + $0x4] sm:$0xf]
    %v406 = vld [vmem:[#allocation8 + $0x8] sm:$0xf]
    %v407 = vld [vmem:[#allocation8 + $0xc] sm:$0xf]
    %v408 = vld [vmem:[#allocation8 + $0x10] sm:$0xf]
    %v409 = vld [vmem:[#allocation8 + $0x14] sm:$0xf]
    %v410 = vld [vmem:[#allocation8 + $0x18] sm:$0xf]
    %v411 = vld [vmem:[#allocation8 + $0x1c] sm:$0xf]
    %v412 = vld [vmem:[#allocation8 + $0x20] sm:$0xf]
    %v413 = vld [vmem:[#allocation8 + $0x24] sm:$0xf]
    %v414 = vld [vmem:[#allocation8 + $0x28] sm:$0xf]
    %v415 = vld [vmem:[#allocation8 + $0x2c] sm:$0xf]
    %v416 = vld [vmem:[#allocation8 + $0x30] sm:$0xf]
    %v417 = vld [vmem:[#allocation8 + $0x34] sm:$0xf]
    %v418 = vld [vmem:[#allocation8 + $0x38] sm:$0xf]
    %v419 = vld [vmem:[#allocation8 + $0x3c] sm:$0xf]
    %v420 = vld [vmem:[#allocation8 + $0x40] sm:$0xf]
    %v421 = vld [vmem:[#allocation8 + $0x44] sm:$0xf]
    %v422 = vld [vmem:[#allocation8 + $0x48] sm:$0xf]
    %v423 = vld [vmem:[#allocation8 + $0x4c] sm:$0xf]
    %v424 = vld [vmem:[#allocation8 + $0x50] sm:$0xf]
    %v425 = vld [vmem:[#allocation8 + $0x54] sm:$0xf]
    %v426 = vld [vmem:[#allocation8 + $0x58] sm:$0xf]
    %v427 = vld [vmem:[#allocation8 + $0x5c] sm:$0xf]
    %v428 = vld [vmem:[#allocation8 + $0x60] sm:$0xf]
    %v429 = vld [vmem:[#allocation8 + $0x64] sm:$0xf]
    %v430 = vld [vmem:[#allocation8 + $0x68] sm:$0xf]
    %v431 = vld [vmem:[#allocation8 + $0x6c] sm:$0xf]
    %v432 = vld [vmem:[#allocation8 + $0x70] sm:$0xf]
    %v433 = vld [vmem:[#allocation8 + $0x74] sm:$0xf]
    %v434 = vld [vmem:[#allocation8 + $0x78] sm:$0xf]
    %v435 = vld [vmem:[#allocation8 + $0x7c] sm:$0xf]
    %v436 = vld [vmem:[%s6] sm:$0x1]
    %v438 = vlaneseq
    %v439 = vshrl.u32 %v438, 7
    %v440 = vsub.s32 0, %v439
    %v441 = vrot.slane %v436, %v440
    %v475 = vunpack.c.l.b16 %v404
    %v476 = vunpack.c.l.b16 %v405
    %v477 = vunpack.c.l.b16 %v406
    %v478 = vunpack.c.l.b16 %v407
    %v479 = vunpack.c.l.b16 %v408
    %v480 = vunpack.c.l.b16 %v409
    %v481 = vunpack.c.l.b16 %v410
    %v482 = vunpack.c.l.b16 %v411
    %v483 = vunpack.c.l.b16 %v412
    %v484 = vunpack.c.l.b16 %v413
    %v485 = vunpack.c.l.b16 %v414
    %v486 = vunpack.c.l.b16 %v415
    %v487 = vunpack.c.l.b16 %v416
    %v488 = vunpack.c.l.b16 %v417
    %v489 = vunpack.c.l.b16 %v418
    %v490 = vunpack.c.l.b16 %v419
    %v491 = vunpack.c.l.b16 %v420
    %v492 = vunpack.c.l.b16 %v421
    %v493 = vunpack.c.l.b16 %v422
    %v494 = vunpack.c.l.b16 %v423
    %v495 = vunpack.c.l.b16 %v424
    %v496 = vunpack.c.l.b16 %v425
    %v497 = vunpack.c.l.b16 %v426
    %v498 = vunpack.c.l.b16 %v427
    %v499 = vunpack.c.l.b16 %v428
    %v500 = vunpack.c.l.b16 %v429
    %v501 = vunpack.c.l.b16 %v430
    %v502 = vunpack.c.l.b16 %v431
    %v503 = vunpack.c.l.b16 %v432
    %v504 = vunpack.c.l.b16 %v433
    %v505 = vunpack.c.l.b16 %v434
    %v506 = vunpack.c.l.b16 %v435
    %v507 = vpack.c.b16 %v476, %v475
    %v508 = vpack.c.b16 %v478, %v477
    %v509 = vpack.c.b16 %v480, %v479
    %v510 = vpack.c.b16 %v482, %v481
    %v511 = vpack.c.b16 %v484, %v483
    %v512 = vpack.c.b16 %v486, %v485
    %v513 = vpack.c.b16 %v488, %v487
    %v514 = vpack.c.b16 %v490, %v489
    %v515 = vpack.c.b16 %v492, %v491
    %v516 = vpack.c.b16 %v494, %v493
    %v517 = vpack.c.b16 %v496, %v495
    %v518 = vpack.c.b16 %v498, %v497
    %v519 = vpack.c.b16 %v500, %v499
    %v520 = vpack.c.b16 %v502, %v501
    %v521 = vpack.c.b16 %v504, %v503
    %v522 = vpack.c.b16 %v506, %v505
    %539 = vmatprep.subr.bf16.mxu0 0
    %540 = vmatpush1.bf16.msra.mxu0 %v507
    %541 = vmatprep.subr.bf16.mxu0 0
    %542 = vmatpush1.bf16.msra.mxu0 %v508
    %543 = vmatprep.subr.bf16.mxu0 0
    %544 = vmatpush1.bf16.msra.mxu0 %v509
    %545 = vmatprep.subr.bf16.mxu0 0
    %546 = vmatpush1.bf16.msra.mxu0 %v510
    %547 = vmatprep.subr.bf16.mxu0 0
    %548 = vmatpush1.bf16.msra.mxu0 %v511
    %549 = vmatprep.subr.bf16.mxu0 0
    %550 = vmatpush1.bf16.msra.mxu0 %v512
    %551 = vmatprep.subr.bf16.mxu0 0
    %552 = vmatpush1.bf16.msra.mxu0 %v513
    %553 = vmatprep.subr.bf16.mxu0 0
    %554 = vmatpush1.bf16.msra.mxu0 %v514
    %555 = vmatprep.subr.bf16.mxu0 0
    %556 = vmatpush1.bf16.msra.mxu0 %v515
    %557 = vmatprep.subr.bf16.mxu0 0
    %558 = vmatpush1.bf16.msra.mxu0 %v516
    %559 = vmatprep.subr.bf16.mxu0 0
    %560 = vmatpush1.bf16.msra.mxu0 %v517
    %561 = vmatprep.subr.bf16.mxu0 0
    %562 = vmatpush1.bf16.msra.mxu0 %v518
    %563 = vmatprep.subr.bf16.mxu0 0
    %564 = vmatpush1.bf16.msra.mxu0 %v519
    %565 = vmatprep.subr.bf16.mxu0 0
    %566 = vmatpush1.bf16.msra.mxu0 %v520
    %567 = vmatprep.subr.bf16.mxu0 0
    %568 = vmatpush1.bf16.msra.mxu0 %v521
    %569 = vmatprep.subr.bf16.mxu0 0
    %570 = vmatpush1.bf16.msra.mxu0 %v522
    %571 = vmatprep.mubr.bf16.mxu0 %v403
    %572 = vmatmul.mubr.bf16.gmra.mrb[0].mxu0 %v402
    %v573 = vpop.f32.mrb[0].mxu0
    %v574 = vadd.f32 %v441, %v573
    %v575 = vpop.f32.mrb[0].mxu0
    %v576 = vpop.f32.mrb[0].mxu0
    %v577 = vpop.f32.mrb[0].mxu0
    %578 = vdwg.mxu0
    %v579 = vlaneseq
    %v580 = vand.u32 %v579, 127
    %vm581 = vcmp.lt.s32.totalorder %v580, 4
    %v582 = vsel %vm581, %v574, -1e+30
    %583 = vmax.xlane.f32.xlu0 %v582
    %v584 = vpop.xlane.xlu0 %583
    %v585 = vsub.f32 %v582, %v584
    %v586 = vmul.f32 %v585, 1.442695
    %v587 = vpow.pop %v586
    %v588 = vsel %vm581, %v587, 0.0
    %589 = vadd.xlane.f32.xlu0 %v588
    %v590 = vpop.xlane.xlu0 %589
    %v591 = vrcp.pop %v590
    %v592 = vmul.f32 %v588, %v591
    %vm593 = vcmp.eq.s32.totalorder %v580, 4
    %v594 = vsel %vm593, %v574, 0.0
    %v595 = vsel %vm581, %v592, %v594
    %596 = vst [vmem:[#allocation10] sm:$0xff] %v595
    // Predicated region
    $region46: #{tpu_custom_call.1} parent=1 // pred_check
      _
    $region47: #{tpu_custom_call.1} parent=1 // pred_check_branch
      %598 = sbr.rel (0) target = $region49
    $region48: #{tpu_custom_call.1} parent=1 // pred_region
      %s600 = ssub.s32 128, 128
      %601 = vsyncadd [#allocation4], %s600
      %s603 = sshll.u32 [#allocation10], 4
      %s604 = int_to_ptr.vmem [resolvable:$true] %s603
      %606 = dma.vmem_to_hbm [thread:$0]  %s604, 128, %s7, [#allocation4]
    $region49: #{tpu_custom_call.1} parent=1 // pred_fallthru
      _
    // Predicated region
    $region50: #{tpu_custom_call.1} parent=1 // pred_check
      _
    $region51: #{tpu_custom_call.1} parent=1 // pred_check_branch
      %608 = sbr.rel (0) target = $region53
    $region52: #{tpu_custom_call.1} parent=1 // pred_region
      %609 = dma.done [#allocation4], 128
    $region53: #{tpu_custom_call.1} parent=1 // pred_fallthru
      _
    %610 = vsyncpa [#allocation3], 1
    %611 = vsyncpa [#allocation6], 1
    %612 = vsyncpa [#allocation9], 1
    %613 = vsyncpa [#allocation4], 1

</llo_original>
